<compile_context>
chip_gen: v6e
topology: v6e:2x2x1
jax: 0.10.0
libtpu: 0.0.40
codegen_flags: <defaults>
</compile_context>

<pallas_src>
import functools

import jax
import jax.numpy as jnp
import numpy as np
from jax.experimental import pallas as pl
from jax.experimental.pallas import tpu as pltpu


def _round_up(x, m):
    return (x + m - 1) // m * m


def _vmem_capacity_bytes():
    try:
        return int(pltpu.get_tpu_info().vmem_capacity_bytes)
    except Exception:
        return 64 * 2**20  # conservative (v7x per-TC budget)


# ----------------------------------------------------------------------------
# Kernels
# ----------------------------------------------------------------------------
def _encoder_kernel_single(x_ref, w_ref, b_ref, o_ref, *,
                           no_imgnorm, eps, approx_recip, matmul_dtype):
    """Full-K in one shot: no accumulator scratch needed."""
    feats = jnp.dot(x_ref[...].astype(matmul_dtype), w_ref[...],
                    preferred_element_type=jnp.float32) + b_ref[...]
    if not no_imgnorm:
        ss = jnp.sum(feats * feats, axis=-1, keepdims=True)
        inv = pl.reciprocal(jnp.sqrt(ss) + eps, approx=approx_recip)
        feats = feats * inv
    o_ref[...] = feats.astype(o_ref.dtype)


def _encoder_kernel_tiled(x_ref, w_ref, b_ref, o_ref, acc_ref, *,
                          no_imgnorm, eps, approx_recip, matmul_dtype):
    """K-tiled reduction into an f32 VMEM accumulator."""
    k = pl.program_id(1)
    part = jnp.dot(x_ref[...].astype(matmul_dtype), w_ref[...],
                   preferred_element_type=jnp.float32)

    @pl.when(k == 0)
    def _():
        # Direct store of first partial + bias: no zero-init pass, bias folded.
        acc_ref[...] = part + b_ref[...]

    @pl.when(k > 0)
    def _():
        acc_ref[...] += part

    @pl.when(k == pl.num_programs(1) - 1)
    def _():
        feats = acc_ref[...]
        if not no_imgnorm:
            ss = jnp.sum(feats * feats, axis=-1, keepdims=True)
            inv = pl.reciprocal(jnp.sqrt(ss) + eps, approx=approx_recip)
            o_ref[...] = (feats * inv).astype(o_ref.dtype)
        else:
            o_ref[...] = feats.astype(o_ref.dtype)


# ----------------------------------------------------------------------------
# Parameter prep (run ONCE at init / state-dict load, never per forward call)
# ----------------------------------------------------------------------------
def prepare_params(weight_t, bias, *, matmul_dtype=jnp.bfloat16):
    """Pre-cast + pre-pad the Linear parameters for the kernel.

    weight_t: [img_dim, embed_size]  (= fc.weight.T)
    bias:     [embed_size]
    """
    img_dim, embed_size = weight_t.shape
    k_pad = _round_up(img_dim, 256)     # MXU-friendly reduction dim
    n_pad = _round_up(embed_size, 128)  # lane-dense output stores
    w_p = jnp.pad(jnp.asarray(weight_t).astype(matmul_dtype),
                  ((0, k_pad - img_dim), (0, n_pad - embed_size)))
    b_p = jnp.pad(jnp.asarray(bias).astype(jnp.float32).reshape(1, embed_size),
                  ((0, 0), (0, n_pad - embed_size)))
    return {"weight": w_p, "bias": b_p,
            "img_dim": img_dim, "embed_size": embed_size}


def init_params(img_dim, embed_size, key, *, matmul_dtype=jnp.bfloat16):
    """Xavier-uniform init matching the PyTorch module's init_weights()."""
    r = np.sqrt(6.0) / np.sqrt(img_dim + embed_size)
    weight_t = jax.random.uniform(key, (img_dim, embed_size),
                                  minval=-r, maxval=r, dtype=jnp.float32)
    bias = jnp.zeros((embed_size,), dtype=jnp.float32)
    return prepare_params(weight_t, bias, matmul_dtype=matmul_dtype)


def params_from_torch_linear(weight, bias, *, matmul_dtype=jnp.bfloat16):
    """Convert a PyTorch nn.Linear state_dict ([embed, img_dim] weight) into
    the pre-transposed, pre-cast, pre-padded layout this kernel expects."""
    return prepare_params(jnp.transpose(jnp.asarray(weight)),
                          jnp.asarray(bias), matmul_dtype=matmul_dtype)


# ----------------------------------------------------------------------------
# Forward pass
# ----------------------------------------------------------------------------
def encoder_image_precomp(images, params, *, no_imgnorm=False, eps=1e-8,
                          tile_m=512, tile_k=None, out_dtype=jnp.float32,
                          approx_reciprocal=True):
    """Forward pass of EncoderImagePrecomp.

    images: [..., img_dim] (float; cast to bf16 inside the kernel)
    params: dict from prepare_params()/init_params()/params_from_torch_linear()
    returns [..., embed_size] out_dtype (default f32, same math as the module)
    """
    w_p, b_p = params["weight"], params["bias"]
    img_dim, embed_size = params["img_dim"], params["embed_size"]
    k_pad, n_pad = w_p.shape
    assert images.shape[-1] == img_dim
    lead_shape = images.shape[:-1]

    x2d = images.reshape(-1, img_dim)
    m = x2d.shape[0]

    # --- row tiling (multiple of 8; >=2 tiles for v7x megacore when M big) ---
    tile_m = max(8, min(tile_m, _round_up(m, 8)))
    tile_m = _round_up(tile_m, 8)
    if m > 256 and pl.cdiv(m, tile_m) < 2:
        tile_m = _round_up(pl.cdiv(m, 2), 8)
    m_pad = _round_up(m, tile_m)
    num_i = m_pad // tile_m

    # --- K tiling derived from the real chip's VMEM capacity ---------------
    x_itemsize = 4                                   # x stays f32 in VMEM
    w_itemsize = jnp.dtype(w_p.dtype).itemsize
    out_itemsize = jnp.dtype(out_dtype).itemsize
    matmul_dtype = w_p.dtype

    def vmem_need(tk):
        nk = k_pad // tk
        w_bufs = 1 if nk == 1 else 2
        acc = tile_m * n_pad * 4 if nk > 1 else 0
        return (w_bufs * tk * n_pad * w_itemsize      # weight buffers
                + 2 * tile_m * tk * x_itemsize        # x double buffer (f32)
                + 2 * tile_m * n_pad * out_itemsize   # output double buffer
                + 2 * n_pad * 4                       # bias
                + acc                                 # f32 accumulator
                + tile_m * n_pad * 4)                 # epilogue/internal temp

    candidates = sorted({k_pad // d for d in range(1, k_pad // 128 + 1)
                         if k_pad % d == 0 and (k_pad // d) % 128 == 0},
                        reverse=True)
    vmem_cap = _vmem_capacity_bytes()
    budget = int(0.6 * vmem_cap)
    if tile_k is not None:
        fitting = [c for c in candidates if c <= tile_k]
        candidates = fitting if fitting else [candidates[-1]]
    chosen_tk = candidates[-1]
    for c in candidates:
        if vmem_need(c) <= budget:
            chosen_tk = c
            break
    tile_k = chosen_tk
    num_k = k_pad // tile_k

    vmem_limit = int(min(0.9 * vmem_cap,
                         max(32 * 2**20, 1.25 * vmem_need(tile_k) + (4 << 20))))

    # --- pad activations only (zero padding exact for matmul and L2 norm) --
    if m_pad > m or k_pad > img_dim:
        x_p = jnp.pad(x2d, ((0, m_pad - m), (0, k_pad - img_dim)))
    else:
        x_p = x2d

    # --- cost hint (weights are re-streamed once per row tile when K-tiled) -
    w_reads = 1 if num_k == 1 else num_i
    cost = pl.CostEstimate(
        flops=2 * m_pad * k_pad * n_pad,
        transcendentals=0 if no_imgnorm else 2 * m_pad,   # sqrt + rcp per row
        bytes_accessed=(x_p.size * x_itemsize
                        + w_reads * w_p.size * w_itemsize
                        + b_p.size * 4
                        + m_pad * n_pad * out_itemsize),
    )

    common = dict(no_imgnorm=no_imgnorm, eps=eps,
                  approx_recip=approx_reciprocal, matmul_dtype=matmul_dtype)

    if num_k == 1:
        kernel = functools.partial(_encoder_kernel_single, **common)
        grid_spec = pltpu.PrefetchScalarGridSpec(
            num_scalar_prefetch=0,
            grid=(num_i,),
            in_specs=[
                pl.BlockSpec((tile_m, k_pad), lambda i: (i, 0)),          # x
                pl.BlockSpec((k_pad, n_pad), lambda i: (0, 0),            # W^T
                             pipeline_mode=pl.Buffered(1)),
                pl.BlockSpec((1, n_pad), lambda i: (0, 0),                # bias
                             pipeline_mode=pl.Buffered(1)),
            ],
            out_specs=pl.BlockSpec((tile_m, n_pad), lambda i: (i, 0)),
        )
        dim_sem = ("parallel",)
    else:
        kernel = functools.partial(_encoder_kernel_tiled, **common)
        grid_spec = pltpu.PrefetchScalarGridSpec(
            num_scalar_prefetch=0,
            grid=(num_i, num_k),
            in_specs=[
                pl.BlockSpec((tile_m, tile_k), lambda i, k: (i, k)),      # x
                pl.BlockSpec((tile_k, n_pad), lambda i, k: (k, 0)),       # W^T
                pl.BlockSpec((1, n_pad), lambda i, k: (0, 0),             # bias
                             pipeline_mode=pl.Buffered(1)),
            ],
            out_specs=pl.BlockSpec((tile_m, n_pad), lambda i, k: (i, 0)),
            scratch_shapes=[pltpu.VMEM((tile_m, n_pad), jnp.float32)],
        )
        dim_sem = ("parallel", "arbitrary")

    out = pl.pallas_call(
        kernel,
        out_shape=jax.ShapeDtypeStruct((m_pad, n_pad), out_dtype),
        grid_spec=grid_spec,
        compiler_params=pltpu.CompilerParams(
            dimension_semantics=dim_sem,
            vmem_limit_bytes=vmem_limit),
        cost_estimate=cost,
    )(x_p, w_p, b_p)

    out = out[:m, :embed_size]
    return out.reshape(*lead_shape, embed_size)


# ----------------------------------------------------------------------------
if __name__ == "__main__":
    key = jax.random.PRNGKey(0)
    k_img, k_w = jax.random.split(key)

    batch, regions, img_dim, embed_size = 2, 4, 32, 32   # M = 8 rows
    images = jax.random.normal(k_img, (batch, regions, img_dim),
                               dtype=jnp.float32)

    # Param prep happens ONCE here (cast + pad), never per forward call.
    r = np.sqrt(6.0) / np.sqrt(img_dim + embed_size)
    weight_t = jax.random.uniform(k_w, (img_dim, embed_size),
                                  minval=-r, maxval=r, dtype=jnp.float32)
    bias = jnp.zeros((embed_size,), dtype=jnp.float32)
    params = prepare_params(weight_t, bias)

    # normalized path (default module behavior)
    feats = encoder_image_precomp(images, params, no_imgnorm=False)
    feats = jax.block_until_ready(feats)

    # plain-JAX f32 reference (bf16 matmul operands => relaxed tolerance)
    ref = images @ weight_t + bias
    ref_n = ref / (jnp.sqrt(jnp.sum(ref * ref, axis=-1, keepdims=True)) + 1e-8)
    np.testing.assert_allclose(np.asarray(feats), np.asarray(ref_n),
                               rtol=2e-2, atol=2e-2)

    # no_imgnorm path
    feats2 = jax.block_until_ready(
        encoder_image_precomp(images, params, no_imgnorm=True))
    np.testing.assert_allclose(np.asarray(feats2), np.asarray(ref),
                               rtol=2e-2, atol=2e-2)

    # exercise the K-tiled (accumulator) path with a larger shape
    big_img_dim, big_embed = 512, 256
    kx, kw = jax.random.split(jax.random.PRNGKey(1))
    big_x = jax.random.normal(kx, (6, big_img_dim), dtype=jnp.float32)
    big_wt = jax.random.uniform(kw, (big_img_dim, big_embed),
                                minval=-0.05, maxval=0.05, dtype=jnp.float32)
    big_b = jnp.zeros((big_embed,), dtype=jnp.float32)
    big_params = prepare_params(big_wt, big_b)
    big_out = jax.block_until_ready(
        encoder_image_precomp(big_x, big_params, no_imgnorm=False,
                              tile_k=256))                 # force num_k > 1
    big_ref = big_x @ big_wt + big_b
    big_ref = big_ref / (jnp.sqrt(jnp.sum(big_ref * big_ref, axis=-1,
                                          keepdims=True)) + 1e-8)
    np.testing.assert_allclose(np.asarray(big_out), np.asarray(big_ref),
                               rtol=2e-2, atol=2e-2)

    print("KERNEL_OK")
</pallas_src>

<mosaic_0001>
module attributes {stable_mosaic.version = 11 : i64} {
  func.func @_encoder_kernel_single(%arg0: i32, %arg1: memref<8x256xf32, #tpu.memory_space<vmem>>, %arg2: memref<256x128xbf16, #tpu.memory_space<vmem>>, %arg3: memref<1x128xf32, #tpu.memory_space<vmem>>, %arg4: memref<8x128xf32, #tpu.memory_space<vmem>>) attributes {dimension_semantics = [#tpu.dimension_semantics<parallel>], iteration_bounds = array<i64: 1>, scalar_prefetch = 0 : i64, scratch_operands = 0 : i64, tpu.core_type = #tpu.core_type<tc>, window_params = [{transform_indices = @transform_0, window_bounds = array<i64: 8, 256>}, {pipeline_mode = #tpu.pipeline_mode<synchronous>, transform_indices = @transform_1, window_bounds = array<i64: 256, 128>}, {pipeline_mode = #tpu.pipeline_mode<synchronous>, transform_indices = @transform_2, window_bounds = array<i64: 1, 128>}, {transform_indices = @transform_3, window_bounds = array<i64: 8, 128>}]} {
    %c0 = arith.constant 0 : index
    %c0_0 = arith.constant 0 : index
    %0 = vector.load %arg1[%c0, %c0_0] : memref<8x256xf32, #tpu.memory_space<vmem>>, vector<8x256xf32>
    %1 = arith.truncf %0 : vector<8x256xf32> to vector<8x256xbf16>
    %c0_1 = arith.constant 0 : index
    %c0_2 = arith.constant 0 : index
    %2 = vector.load %arg2[%c0_1, %c0_2] : memref<256x128xbf16, #tpu.memory_space<vmem>>, vector<256x128xbf16>
    %cst = arith.constant dense<0.000000e+00> : vector<8x128xf32>
    %3 = tpu.matmul %1, %2, %cst {dimension_numbers = #tpu.dot_dimension_numbers<[1], [0], [0], [1], [0, 0, 1, 1], [], []>} : vector<8x256xbf16>, vector<256x128xbf16>, vector<8x128xf32> -> vector<8x128xf32>
    %c0_3 = arith.constant 0 : index
    %c0_4 = arith.constant 0 : index
    %4 = vector.load %arg3[%c0_3, %c0_4] : memref<1x128xf32, #tpu.memory_space<vmem>>, vector<1x128xf32>
    %5 = vector.broadcast %4 : vector<1x128xf32> to vector<8x128xf32>
    %6 = arith.addf %3, %5 : vector<8x128xf32>
    %7 = arith.mulf %6, %6 : vector<8x128xf32>
    %cst_5 = arith.constant dense<0.000000e+00> : vector<8xf32>
    %8 = vector.multi_reduction <add>, %7, %cst_5 [1] : vector<8x128xf32> to vector<8xf32>
    %9 = vector.shape_cast %8 : vector<8xf32> to vector<8x1xf32>
    %10 = math.sqrt %9 : vector<8x1xf32>
    %cst_6 = arith.constant 9.99999993E-9 : f32
    %11 = vector.broadcast %cst_6 : f32 to vector<8x1xf32>
    %12 = arith.addf %10, %11 : vector<8x1xf32>
    %13 = tpu.reciprocal %12 {approx = true} : vector<8x1xf32> -> vector<8x1xf32>
    %14 = vector.broadcast %13 : vector<8x1xf32> to vector<8x128xf32>
    %15 = arith.mulf %6, %14 : vector<8x128xf32>
    %c0_7 = arith.constant 0 : index
    %c0_8 = arith.constant 0 : index
    %16 = vector.load %arg4[%c0_7, %c0_8] : memref<8x128xf32, #tpu.memory_space<vmem>>, vector<8x128xf32>
    tpu.vector_store %arg4[%c0_7, %c0_8], %15 {strides = array<i32>} : memref<8x128xf32, #tpu.memory_space<vmem>>, vector<8x128xf32>,
    return
  }
  func.func @transform_0(%arg0: i32) -> (i32, i32) {
    %c0_i32 = arith.constant 0 : i32
    %c0_i32_0 = arith.constant 0 : i32
    return %arg0, %c0_i32 : i32, i32
  }
  func.func @transform_1(%arg0: i32) -> (i32, i32) {
    %c0_i32 = arith.constant 0 : i32
    %c0_i32_0 = arith.constant 0 : i32
    %c0_i32_1 = arith.constant 0 : i32
    return %c0_i32, %c0_i32_0 : i32, i32
  }
  func.func @transform_2(%arg0: i32) -> (i32, i32) {
    %c0_i32 = arith.constant 0 : i32
    %c0_i32_0 = arith.constant 0 : i32
    %c0_i32_1 = arith.constant 0 : i32
    return %c0_i32, %c0_i32_0 : i32, i32
  }
  func.func @transform_3(%arg0: i32) -> (i32, i32) {
    %c0_i32 = arith.constant 0 : i32
    %c0_i32_0 = arith.constant 0 : i32
    return %arg0, %c0_i32 : i32, i32
  }
}

</mosaic_0001>

<llo_original>
// kernel: tpu_custom_call.1
$region0: #{tpu_custom_call.1}
  #allocation0 [shape = 'u32[]', space=smem, size = 0x4, offset = 0x4, fixed_abs, tag = 'smem constant byte address 0x4 - core index']
  #allocation1 [shape = 'u32[144,128]{1,0:T(1,128)}', space=vmem, size = 0x12000, scoped, tag = 'internal scratch']
  %s0 = inlined_call_operand.hbm [shape: f32[8,256], index: 0, kind: input, shape index: {}]
  %s1 = inlined_call_operand.hbm [shape: bf16[256,128], index: 1, kind: input, shape index: {}]
  %s2 = inlined_call_operand.vmem [shape: f32[1,128], index: 2, kind: input, shape index: {}]
  %s3 = inlined_call_operand.hbm [shape: f32[8,128], index: 3, kind: output, shape index: {}]
  %s4 = sld [smem:[#allocation0]]
  $region30: #{tpu_custom_call.1} parent=0
    _
  %s6 = ssub.s32 1, %s4
  %s7 = scalar_select 0, %s6, %s4
  $region1: #{tpu_custom_call.1} parent=0
    #allocation2 [shape = 'u8[8192]{0}', space=vmem, size = 0x2000, scoped, tag = 'input window, operand 0, single buffered']
    #allocation3 [shape = 's32[1]{0}', space=sflag, size = 0x4, scoped, tag = 'scoped memory for tpu_custom_call.1']
    #allocation4 [shape = 's32[1]{0}', space=sflag, size = 0x4, scoped, tag = 'scoped memory for tpu_custom_call.1']
    #allocation5 [shape = 'u8[65536]{0}', space=vmem, size = 0x10000, scoped, tag = 'input window, operand 1, single buffered']
    #allocation6 [shape = 's32[1]{0}', space=sflag, size = 0x4, scoped, tag = 'scoped memory for tpu_custom_call.1']
    #allocation7 [shape = 'u8[4096]{0}', space=vmem, size = 0x1000, scoped, tag = 'output window, operand 0, single buffered']
    %8 = vsyncpa [#allocation3], 0
    %9 = vsyncpa [#allocation6], 0
    %10 = vsyncpa [#allocation4], 0
    // Predicated region
    $region2: #{tpu_custom_call.1} parent=1 // pred_check
      _
    $region3: #{tpu_custom_call.1} parent=1 // pred_check_branch
      %12 = sbr.rel (0) target = $region5
    $region4: #{tpu_custom_call.1} parent=1 // pred_region
      %s14 = ssub.s32 256, 256
      %15 = vsyncadd [#allocation3], %s14
      %s17 = sshll.u32 [#allocation2], 4
      %s18 = int_to_ptr.vmem [resolvable:$true] %s17
      %20 = dma.hbm_to_vmem [thread:$0]  %s0, 256, %s18, [#allocation3]
    $region5: #{tpu_custom_call.1} parent=1 // pred_fallthru
      _
    // Predicated region
    $region6: #{tpu_custom_call.1} parent=1 // pred_check
      _
    $region7: #{tpu_custom_call.1} parent=1 // pred_check_branch
      %22 = sbr.rel (0) target = $region9
    $region8: #{tpu_custom_call.1} parent=1 // pred_region
      %s24 = ssub.s32 2048, 2048
      %25 = vsyncadd [#allocation6], %s24
      %s26 = sshll.u32 [#allocation5], 4
      %s27 = int_to_ptr.vmem [resolvable:$true] %s26
      %32 = dma.hbm_to_vmem [thread:$0]  %s1, 2048, %s27, [#allocation6], 64, 64, 4
    $region9: #{tpu_custom_call.1} parent=1 // pred_fallthru
      _
    // Predicated region
    $region10: #{tpu_custom_call.1} parent=1 // pred_check
      _
    $region11: #{tpu_custom_call.1} parent=1 // pred_check_branch
      %34 = sbr.rel (0) target = $region13
    $region12: #{tpu_custom_call.1} parent=1 // pred_region
      _
    $region13: #{tpu_custom_call.1} parent=1 // pred_fallthru
      _
    // Predicated region
    $region14: #{tpu_custom_call.1} parent=1 // pred_check
      _
    $region15: #{tpu_custom_call.1} parent=1 // pred_check_branch
      %36 = sbr.rel (0) target = $region17
    $region16: #{tpu_custom_call.1} parent=1 // pred_region
      %37 = dma.done [#allocation3], 256
    $region17: #{tpu_custom_call.1} parent=1 // pred_fallthru
      _
    // Predicated region
    $region18: #{tpu_custom_call.1} parent=1 // pred_check
      _
    $region19: #{tpu_custom_call.1} parent=1 // pred_check_branch
      %39 = sbr.rel (0) target = $region21
    $region20: #{tpu_custom_call.1} parent=1 // pred_region
      %40 = dma.done [#allocation6], 2048
    $region21: #{tpu_custom_call.1} parent=1 // pred_fallthru
      _
    %v42 = vld [vmem:[#allocation2] sm:$0xff]
    %v43 = vld [vmem:[#allocation2 + $0x8] sm:$0xff]
    %v44 = vpack.c.bf16 %v42, %v42
    %v45 = vpack.c.bf16 %v43, %v43
    %v46 = vld [vmem:[#allocation5] sm:$0xf]
    %v47 = vld [vmem:[#allocation5 + $0x4] sm:$0xf]
    %v48 = vld [vmem:[#allocation5 + $0x8] sm:$0xf]
    %v49 = vld [vmem:[#allocation5 + $0xc] sm:$0xf]
    %v50 = vld [vmem:[#allocation5 + $0x10] sm:$0xf]
    %v51 = vld [vmem:[#allocation5 + $0x14] sm:$0xf]
    %v52 = vld [vmem:[#allocation5 + $0x18] sm:$0xf]
    %v53 = vld [vmem:[#allocation5 + $0x1c] sm:$0xf]
    %v54 = vld [vmem:[#allocation5 + $0x20] sm:$0xf]
    %v55 = vld [vmem:[#allocation5 + $0x24] sm:$0xf]
    %v56 = vld [vmem:[#allocation5 + $0x28] sm:$0xf]
    %v57 = vld [vmem:[#allocation5 + $0x2c] sm:$0xf]
    %v58 = vld [vmem:[#allocation5 + $0x30] sm:$0xf]
    %v59 = vld [vmem:[#allocation5 + $0x34] sm:$0xf]
    %v60 = vld [vmem:[#allocation5 + $0x38] sm:$0xf]
    %v61 = vld [vmem:[#allocation5 + $0x3c] sm:$0xf]
    %v62 = vld [vmem:[#allocation5 + $0x40] sm:$0xf]
    %v63 = vld [vmem:[#allocation5 + $0x44] sm:$0xf]
    %v64 = vld [vmem:[#allocation5 + $0x48] sm:$0xf]
    %v65 = vld [vmem:[#allocation5 + $0x4c] sm:$0xf]
    %v66 = vld [vmem:[#allocation5 + $0x50] sm:$0xf]
    %v67 = vld [vmem:[#allocation5 + $0x54] sm:$0xf]
    %v68 = vld [vmem:[#allocation5 + $0x58] sm:$0xf]
    %v69 = vld [vmem:[#allocation5 + $0x5c] sm:$0xf]
    %v70 = vld [vmem:[#allocation5 + $0x60] sm:$0xf]
    %v71 = vld [vmem:[#allocation5 + $0x64] sm:$0xf]
    %v72 = vld [vmem:[#allocation5 + $0x68] sm:$0xf]
    %v73 = vld [vmem:[#allocation5 + $0x6c] sm:$0xf]
    %v74 = vld [vmem:[#allocation5 + $0x70] sm:$0xf]
    %v75 = vld [vmem:[#allocation5 + $0x74] sm:$0xf]
    %v76 = vld [vmem:[#allocation5 + $0x78] sm:$0xf]
    %v77 = vld [vmem:[#allocation5 + $0x7c] sm:$0xf]
    %v78 = vld [vmem:[%s2] sm:$0x1]
    %v80 = vlaneseq
    %v81 = vshrl.u32 %v80, 7
    %v82 = vsub.s32 0, %v81
    %v83 = vrot.slane %v78, %v82
    %v117 = vunpack.c.l.b16 %v46
    %v118 = vunpack.c.l.b16 %v47
    %v119 = vunpack.c.l.b16 %v48
    %v120 = vunpack.c.l.b16 %v49
    %v121 = vunpack.c.l.b16 %v50
    %v122 = vunpack.c.l.b16 %v51
    %v123 = vunpack.c.l.b16 %v52
    %v124 = vunpack.c.l.b16 %v53
    %v125 = vunpack.c.l.b16 %v54
    %v126 = vunpack.c.l.b16 %v55
    %v127 = vunpack.c.l.b16 %v56
    %v128 = vunpack.c.l.b16 %v57
    %v129 = vunpack.c.l.b16 %v58
    %v130 = vunpack.c.l.b16 %v59
    %v131 = vunpack.c.l.b16 %v60
    %v132 = vunpack.c.l.b16 %v61
    %v133 = vunpack.c.l.b16 %v62
    %v134 = vunpack.c.l.b16 %v63
    %v135 = vunpack.c.l.b16 %v64
    %v136 = vunpack.c.l.b16 %v65
    %v137 = vunpack.c.l.b16 %v66
    %v138 = vunpack.c.l.b16 %v67
    %v139 = vunpack.c.l.b16 %v68
    %v140 = vunpack.c.l.b16 %v69
    %v141 = vunpack.c.l.b16 %v70
    %v142 = vunpack.c.l.b16 %v71
    %v143 = vunpack.c.l.b16 %v72
    %v144 = vunpack.c.l.b16 %v73
    %v145 = vunpack.c.l.b16 %v74
    %v146 = vunpack.c.l.b16 %v75
    %v147 = vunpack.c.l.b16 %v76
    %v148 = vunpack.c.l.b16 %v77
    %v149 = vpack.c.b16 %v118, %v117
    %v150 = vpack.c.b16 %v120, %v119
    %v151 = vpack.c.b16 %v122, %v121
    %v152 = vpack.c.b16 %v124, %v123
    %v153 = vpack.c.b16 %v126, %v125
    %v154 = vpack.c.b16 %v128, %v127
    %v155 = vpack.c.b16 %v130, %v129
    %v156 = vpack.c.b16 %v132, %v131
    %v157 = vpack.c.b16 %v134, %v133
    %v158 = vpack.c.b16 %v136, %v135
    %v159 = vpack.c.b16 %v138, %v137
    %v160 = vpack.c.b16 %v140, %v139
    %v161 = vpack.c.b16 %v142, %v141
    %v162 = vpack.c.b16 %v144, %v143
    %v163 = vpack.c.b16 %v146, %v145
    %v164 = vpack.c.b16 %v148, %v147
    %181 = vmatprep.subr.bf16.mxu0 0
    %182 = vmatpush1.bf16.msra.mxu0 %v156
    %183 = vmatprep.subr.bf16.mxu0 0
    %184 = vmatpush1.bf16.msra.mxu0 %v155
    %185 = vmatprep.subr.bf16.mxu0 0
    %186 = vmatpush1.bf16.msra.mxu0 %v154
    %187 = vmatprep.subr.bf16.mxu0 0
    %188 = vmatpush1.bf16.msra.mxu0 %v153
    %189 = vmatprep.subr.bf16.mxu0 0
    %190 = vmatpush1.bf16.msra.mxu0 %v152
    %191 = vmatprep.subr.bf16.mxu0 0
    %192 = vmatpush1.bf16.msra.mxu0 %v151
    %193 = vmatprep.subr.bf16.mxu0 0
    %194 = vmatpush1.bf16.msra.mxu0 %v150
    %195 = vmatprep.subr.bf16.mxu0 0
    %196 = vmatpush1.bf16.msra.mxu0 %v149
    %197 = vmatprep.subr.bf16.mxu0 0
    %198 = vmatpush2.bf16.msra.mxu0 %v164
    %199 = vmatprep.subr.bf16.mxu0 0
    %200 = vmatpush2.bf16.msra.mxu0 %v163
    %201 = vmatprep.subr.bf16.mxu0 0
    %202 = vmatpush2.bf16.msra.mxu0 %v162
    %203 = vmatprep.subr.bf16.mxu0 0
    %204 = vmatpush2.bf16.msra.mxu0 %v161
    %205 = vmatprep.subr.bf16.mxu0 0
    %206 = vmatpush2.bf16.msra.mxu0 %v160
    %207 = vmatprep.subr.bf16.mxu0 0
    %208 = vmatpush2.bf16.msra.mxu0 %v159
    %209 = vmatprep.subr.bf16.mxu0 0
    %210 = vmatpush2.bf16.msra.mxu0 %v158
    %211 = vmatprep.subr.bf16.mxu0 0
    %212 = vmatpush2.bf16.msra.mxu0 %v157
    %213 = vmatprep.mubr.bf16.mxu0 %v45
    %214 = vmatmul.mubr.bf16.gmra.mxu0 %v44
    %v215 = vpop.f32.mrf.mxu0
    %v216 = vadd.f32 %v83, %v215
    %v217 = vpop.f32.mrf.mxu0
    %v218 = vpop.f32.mrf.mxu0
    %v219 = vpop.f32.mrf.mxu0
    %220 = vdwg.mxu0
    %v221 = vmul.f32 %v216, %v216
    %222 = vadd.xlane.f32.xlu0 %v221
    %v223 = vpop.xlane.xlu0 %222
    %v224 = vrsqrt.pop %v223
    %v225 = vmul.f32 %v223, %v224
    %vm226 = vcmp.eq.f32.partialorder %v223, inf
    %v227 = vsel %vm226, %v223, %v225
    %vm228 = vcmp.eq.f32.partialorder %v223, 0.0
    %v229 = vand.u32 %v223, 2147483648
    %v230 = vsel %vm228, %v229, %v227
    %v231 = vadd.f32 %v230, 1e-08
    %v232 = vrcp.pop %v231
    %v233 = vmul.f32 %v216, %v232
    %234 = vst [vmem:[#allocation7] sm:$0xff] %v233
    // Predicated region
    $region22: #{tpu_custom_call.1} parent=1 // pred_check
      _
    $region23: #{tpu_custom_call.1} parent=1 // pred_check_branch
      %236 = sbr.rel (0) target = $region25
    $region24: #{tpu_custom_call.1} parent=1 // pred_region
      %s238 = ssub.s32 128, 128
      %239 = vsyncadd [#allocation4], %s238
      %s241 = sshll.u32 [#allocation7], 4
      %s242 = int_to_ptr.vmem [resolvable:$true] %s241
      %244 = dma.vmem_to_hbm [thread:$0]  %s242, 128, %s3, [#allocation4]
    $region25: #{tpu_custom_call.1} parent=1 // pred_fallthru
      _
    // Predicated region
    $region26: #{tpu_custom_call.1} parent=1 // pred_check
      _
    $region27: #{tpu_custom_call.1} parent=1 // pred_check_branch
      %246 = sbr.rel (0) target = $region29
    $region28: #{tpu_custom_call.1} parent=1 // pred_region
      %247 = dma.done [#allocation4], 128
    $region29: #{tpu_custom_call.1} parent=1 // pred_fallthru
      _
    %248 = vsyncpa [#allocation3], 1
    %249 = vsyncpa [#allocation6], 1
    %250 = vsyncpa [#allocation4], 1

</llo_original>
